<compile_context>
chip_gen: v7x
topology: tpu7x:2x2x1
jax: 0.10.0
libtpu: 0.0.40
codegen_flags: <defaults>
</compile_context>

<pallas_src>
import functools

import jax
import jax.numpy as jnp
from jax import lax
from jax.experimental import pallas as pl
from jax.experimental.pallas import tpu as pltpu

_PAIRWISE_EPS = 1e-6  # torch.nn.functional.pairwise_distance default eps


def _contrastive_loss_kernel(o1_ref, o2_ref, lbl_ref, loss_ref, acc_ref, *,
                             margin, batch, tile_b):
    i = pl.program_id(0)

    @pl.when(i == 0)
    def _init():
        acc_ref[...] = jnp.zeros_like(acc_ref)

    # Compute in f32 regardless of input dtype (inputs may be bf16 upstream;
    # we only pay HBM bytes for the narrow dtype).
    o1 = o1_ref[...].astype(jnp.float32)
    o2 = o2_ref[...].astype(jnp.float32)
    lbl = lbl_ref[...].astype(jnp.float32)                    # (TB, 1)

    diff = o1 - o2 + _PAIRWISE_EPS                            # matches F.pairwise_distance
    sumsq = jnp.sum(diff * diff, axis=-1, keepdims=True)      # (TB, 1) == d**2
    d = jnp.sqrt(sumsq)                                       # euclidean distance (EUP)

    margin_term = (margin - d) * (margin - d)                 # (margin - d)**2
    hinge = jnp.maximum(jnp.float32(0.0), margin_term)        # faithful torch.max(0, ...)

    per_row = lbl * sumsq + (1.0 - lbl) * hinge               # (TB, 1)

    # Mask rows past the true batch size (tail tile when B % TB != 0).
    row = i * tile_b + lax.broadcasted_iota(jnp.int32, per_row.shape, 0)
    per_row = jnp.where(row < batch, per_row, jnp.float32(0.0))

    # Single running sum in a resident (1,1) accumulator (cross-sublane reduce
    # goes to the otherwise-idle XLU).
    acc_ref[...] += jnp.sum(per_row, axis=0, keepdims=True)

    @pl.when(i == pl.num_programs(0) - 1)
    def _finalize():
        loss_ref[...] = acc_ref[...] * jnp.float32(1.0 / batch)


def _pick_tile_b(batch, feat, itemsize):
    # Keep each (TB, D) input block <= ~4 MiB so 2 inputs x 2 pipeline buffers
    # is <= ~16 MiB of VMEM (safe on v7x's 32 MiB scoped default; v5e/v6e have
    # ample headroom). Rows must be a multiple of 8 unless TB == B.
    target_bytes = 4 * 1024 * 1024
    rows = target_bytes // max(1, feat * itemsize)
    rows = max(8, (rows // 8) * 8)
    rows = min(rows, 2048)
    if batch <= rows:
        return batch
    return rows


def contrastive_loss(output1, output2, label, margin=2.0, tile_b=None):
    """output1, output2: (B, D); label: (B, 1). Returns scalar f32 loss."""
    B, D = output1.shape
    assert output2.shape == (B, D)
    assert label.shape == (B, 1)

    if tile_b is None:
        tile_b = _pick_tile_b(B, D, jnp.dtype(output1.dtype).itemsize)
    tile_b = min(int(tile_b), B)
    if tile_b < B:
        # Satisfy the sublane (8) divisibility constraint for partial tiles.
        tile_b = max(8, (tile_b // 8) * 8)
    num_tiles = pl.cdiv(B, tile_b)

    kernel = functools.partial(
        _contrastive_loss_kernel,
        margin=float(margin), batch=B, tile_b=tile_b)

    out = pl.pallas_call(
        kernel,
        out_shape=jax.ShapeDtypeStruct((1, 1), jnp.float32),
        grid=(num_tiles,),
        in_specs=[
            pl.BlockSpec((tile_b, D), lambda i: (i, 0)),
            pl.BlockSpec((tile_b, D), lambda i: (i, 0)),
            pl.BlockSpec((tile_b, 1), lambda i: (i, 0)),
        ],
        out_specs=pl.BlockSpec((1, 1), lambda i: (0, 0)),
        scratch_shapes=[pltpu.VMEM((1, 1), jnp.float32)],
        compiler_params=pltpu.CompilerParams(
            dimension_semantics=("arbitrary",)),  # reduction into resident acc
    )(output1, output2, label)
    return out[0, 0]


def _reference(output1, output2, label, margin=2.0):
    # Pure-JAX reference mirroring the PyTorch module.
    diff = output1.astype(jnp.float32) - output2.astype(jnp.float32) + _PAIRWISE_EPS
    d = jnp.sqrt(jnp.sum(diff * diff, axis=-1, keepdims=True))
    lbl = label.astype(jnp.float32)
    per = lbl * d**2 + (1.0 - lbl) * jnp.maximum(0.0, (margin - d) ** 2)
    return jnp.mean(per)


if __name__ == "__main__":
    key = jax.random.PRNGKey(0)
    k1, k2, k3, k4, k5, k6 = jax.random.split(key, 6)

    # Small siamese-head-sized inputs.
    B, D = 8, 32
    o1 = jax.random.normal(k1, (B, D), dtype=jnp.float32)
    o2 = jax.random.normal(k2, (B, D), dtype=jnp.float32)
    lbl = jax.random.bernoulli(k3, p=0.5, shape=(B, 1)).astype(jnp.float32)

    loss = jax.block_until_ready(contrastive_loss(o1, o2, lbl, margin=2.0))
    ref = jax.block_until_ready(_reference(o1, o2, lbl, margin=2.0))
    assert jnp.allclose(loss, ref, rtol=1e-5, atol=1e-5), (loss, ref)

    # Second check: B not divisible by the tile size -> exercises the
    # multi-step accumulator path and tail-row masking.
    B2, D2 = 20, 32
    o1b = jax.random.normal(k4, (B2, D2), dtype=jnp.float32)
    o2b = jax.random.normal(k5, (B2, D2), dtype=jnp.float32)
    lblb = jax.random.bernoulli(k6, p=0.5, shape=(B2, 1)).astype(jnp.float32)

    loss2 = jax.block_until_ready(
        contrastive_loss(o1b, o2b, lblb, margin=2.0, tile_b=8))
    ref2 = jax.block_until_ready(_reference(o1b, o2b, lblb, margin=2.0))
    assert jnp.allclose(loss2, ref2, rtol=1e-5, atol=1e-5), (loss2, ref2)

    print("KERNEL_OK")
</pallas_src>

<mosaic_0001>
module attributes {stable_mosaic.version = 11 : i64} {
  func.func @_contrastive_loss_kernel(%arg0: i32, %arg1: memref<8x32xf32, #tpu.memory_space<vmem>>, %arg2: memref<8x32xf32, #tpu.memory_space<vmem>>, %arg3: memref<8x1xf32, #tpu.memory_space<vmem>>, %arg4: memref<1x1xf32, #tpu.memory_space<vmem>>, %arg5: memref<1x1xf32, #tpu.memory_space<vmem>>) attributes {dimension_semantics = [#tpu.dimension_semantics<arbitrary>], iteration_bounds = array<i64: 1>, scalar_prefetch = 0 : i64, scratch_operands = 1 : i64, tpu.core_type = #tpu.core_type<tc>, window_params = [{transform_indices = @transform_0, window_bounds = array<i64: 8, 32>}, {transform_indices = @transform_1, window_bounds = array<i64: 8, 32>}, {transform_indices = @transform_2, window_bounds = array<i64: 8, 1>}, {pipeline_mode = #tpu.pipeline_mode<synchronous>, transform_indices = @transform_3, window_bounds = array<i64: 1, 1>}]} {
    %c0_i32 = arith.constant 0 : i32
    %0 = arith.cmpi eq, %arg0, %c0_i32 : i32
    %1 = arith.extui %0 : i1 to i32
    %c0_i32_0 = arith.constant 0 : i32
    %2 = arith.cmpi ne, %1, %c0_i32_0 : i32
    scf.if %2 {
      %cst_20 = arith.constant 0.000000e+00 : f32
      %41 = vector.broadcast %cst_20 : f32 to vector<1x1xf32>
      %c0_21 = arith.constant 0 : index
      %c0_22 = arith.constant 0 : index
      %42 = vector.load %arg5[%c0_21, %c0_22] : memref<1x1xf32, #tpu.memory_space<vmem>>, vector<1x1xf32>
      tpu.vector_store %arg5[%c0_21, %c0_22], %41 {strides = array<i32>} : memref<1x1xf32, #tpu.memory_space<vmem>>, vector<1x1xf32>,
    } else {
    }
    %c0 = arith.constant 0 : index
    %c0_1 = arith.constant 0 : index
    %3 = vector.load %arg1[%c0, %c0_1] : memref<8x32xf32, #tpu.memory_space<vmem>>, vector<8x32xf32>
    %c0_2 = arith.constant 0 : index
    %c0_3 = arith.constant 0 : index
    %4 = vector.load %arg2[%c0_2, %c0_3] : memref<8x32xf32, #tpu.memory_space<vmem>>, vector<8x32xf32>
    %c0_4 = arith.constant 0 : index
    %c0_5 = arith.constant 0 : index
    %5 = vector.load %arg3[%c0_4, %c0_5] : memref<8x1xf32, #tpu.memory_space<vmem>>, vector<8x1xf32>
    %6 = arith.subf %3, %4 : vector<8x32xf32>
    %cst = arith.constant 9.99999997E-7 : f32
    %7 = vector.broadcast %cst : f32 to vector<8x32xf32>
    %8 = arith.addf %6, %7 : vector<8x32xf32>
    %9 = arith.mulf %8, %8 : vector<8x32xf32>
    %cst_6 = arith.constant dense<0.000000e+00> : vector<8xf32>
    %10 = vector.multi_reduction <add>, %9, %cst_6 [1] : vector<8x32xf32> to vector<8xf32>
    %11 = vector.shape_cast %10 : vector<8xf32> to vector<8x1xf32>
    %12 = math.sqrt %11 : vector<8x1xf32>
    %cst_7 = arith.constant 2.000000e+00 : f32
    %13 = vector.broadcast %cst_7 : f32 to vector<8x1xf32>
    %14 = arith.subf %13, %12 : vector<8x1xf32>
    %cst_8 = arith.constant 2.000000e+00 : f32
    %15 = vector.broadcast %cst_8 : f32 to vector<8x1xf32>
    %16 = arith.subf %15, %12 : vector<8x1xf32>
    %17 = arith.mulf %14, %16 : vector<8x1xf32>
    %cst_9 = arith.constant 0.000000e+00 : f32
    %18 = vector.broadcast %cst_9 : f32 to vector<8x1xf32>
    %19 = arith.maximumf %18, %17 : vector<8x1xf32>
    %20 = arith.mulf %5, %11 : vector<8x1xf32>
    %cst_10 = arith.constant 1.000000e+00 : f32
    %21 = vector.broadcast %cst_10 : f32 to vector<8x1xf32>
    %22 = arith.subf %21, %5 : vector<8x1xf32>
    %23 = arith.mulf %22, %19 : vector<8x1xf32>
    %24 = arith.addf %20, %23 : vector<8x1xf32>
    %c8_i32 = arith.constant 8 : i32
    %25 = arith.muli %arg0, %c8_i32 : i32
    %26 = tpu.iota {dimensions = array<i32: 0>} : vector<8x1xi32>
    %27 = vector.broadcast %25 : i32 to vector<8x1xi32>
    %28 = arith.addi %27, %26 : vector<8x1xi32>
    %c8_i32_11 = arith.constant 8 : i32
    %29 = vector.broadcast %c8_i32_11 : i32 to vector<8x1xi32>
    %30 = arith.cmpi slt, %28, %29 : vector<8x1xi32>
    %cst_12 = arith.constant 0.000000e+00 : f32
    %31 = vector.broadcast %cst_12 : f32 to vector<8x1xf32>
    %32 = arith.select %30, %24, %31 : vector<8x1xi1>, vector<8x1xf32>
    %c0_13 = arith.constant 0 : index
    %c0_14 = arith.constant 0 : index
    %33 = vector.load %arg5[%c0_13, %c0_14] : memref<1x1xf32, #tpu.memory_space<vmem>>, vector<1x1xf32>
    %cst_15 = arith.constant dense<0.000000e+00> : vector<1xf32>
    %34 = vector.multi_reduction <add>, %32, %cst_15 [0] : vector<8x1xf32> to vector<1xf32>
    %35 = vector.shape_cast %34 : vector<1xf32> to vector<1x1xf32>
    %36 = arith.addf %33, %35 : vector<1x1xf32>
    %c0_16 = arith.constant 0 : index
    %c0_17 = arith.constant 0 : index
    %37 = vector.load %arg5[%c0_16, %c0_17] : memref<1x1xf32, #tpu.memory_space<vmem>>, vector<1x1xf32>
    tpu.vector_store %arg5[%c0_16, %c0_17], %36 {strides = array<i32>} : memref<1x1xf32, #tpu.memory_space<vmem>>, vector<1x1xf32>,
    %c0_i32_18 = arith.constant 0 : i32
    %38 = arith.cmpi eq, %arg0, %c0_i32_18 : i32
    %39 = arith.extui %38 : i1 to i32
    %c0_i32_19 = arith.constant 0 : i32
    %40 = arith.cmpi ne, %39, %c0_i32_19 : i32
    scf.if %40 {
      %c0_20 = arith.constant 0 : index
      %c0_21 = arith.constant 0 : index
      %41 = vector.load %arg5[%c0_20, %c0_21] : memref<1x1xf32, #tpu.memory_space<vmem>>, vector<1x1xf32>
      %cst_22 = arith.constant 1.250000e-01 : f32
      %42 = vector.broadcast %cst_22 : f32 to vector<1x1xf32>
      %43 = arith.mulf %41, %42 : vector<1x1xf32>
      %c0_23 = arith.constant 0 : index
      %c0_24 = arith.constant 0 : index
      %44 = vector.load %arg4[%c0_23, %c0_24] : memref<1x1xf32, #tpu.memory_space<vmem>>, vector<1x1xf32>
      tpu.vector_store %arg4[%c0_23, %c0_24], %43 {strides = array<i32>} : memref<1x1xf32, #tpu.memory_space<vmem>>, vector<1x1xf32>,
    } else {
    }
    return
  }
  func.func @transform_0(%arg0: i32) -> (i32, i32) {
    %c0_i32 = arith.constant 0 : i32
    %c0_i32_0 = arith.constant 0 : i32
    return %arg0, %c0_i32 : i32, i32
  }
  func.func @transform_1(%arg0: i32) -> (i32, i32) {
    %c0_i32 = arith.constant 0 : i32
    %c0_i32_0 = arith.constant 0 : i32
    return %arg0, %c0_i32 : i32, i32
  }
  func.func @transform_2(%arg0: i32) -> (i32, i32) {
    %c0_i32 = arith.constant 0 : i32
    %c0_i32_0 = arith.constant 0 : i32
    return %arg0, %c0_i32 : i32, i32
  }
  func.func @transform_3(%arg0: i32) -> (i32, i32) {
    %c0_i32 = arith.constant 0 : i32
    %c0_i32_0 = arith.constant 0 : i32
    %c0_i32_1 = arith.constant 0 : i32
    return %c0_i32, %c0_i32_0 : i32, i32
  }
}

</mosaic_0001>

<llo_original>
// kernel: tpu_custom_call.1
$region0: #{tpu_custom_call.1}
  #allocation0 [shape = 'u32[]', space=smem, size = 0x4, offset = 0x4, fixed_abs, tag = 'smem constant byte address 0x4 - core index']
  #allocation1 [shape = 'u32[144,128]{1,0:T(1,128)}', space=vmem, size = 0x12000, scoped, tag = 'internal scratch']
  #allocation2 [shape = 'f32[1,1]{1,0:T(1,128)}', space=vmem, size = 0x200, scoped, tag = 'scratch operand']
  %s0 = inlined_call_operand.vmem [shape: f32[8,32], index: 0, kind: input, shape index: {}]
  %s1 = inlined_call_operand.hbm [shape: f32[8,32], index: 1, kind: input, shape index: {}]
  %s2 = inlined_call_operand.vmem [shape: f32[8,1], index: 2, kind: input, shape index: {}]
  %s3 = inlined_call_operand.hbm [shape: f32[1,1], index: 3, kind: output, shape index: {}]
  %s4 = sld [smem:[#allocation0]]
  $region34: #{tpu_custom_call.1} parent=0
    _
  %s6 = ssub.s32 1, %s4
  %s7 = scalar_select 0, %s6, %s4
  $region1: #{tpu_custom_call.1} parent=0
    #allocation3 [shape = 'u8[4096]{0}', space=vmem, size = 0x1000, scoped, tag = 'input window, operand 1, single buffered']
    #allocation4 [shape = 's32[1]{0}', space=sflag, size = 0x4, scoped, tag = 'scoped memory for tpu_custom_call.1']
    #allocation5 [shape = 's32[1]{0}', space=sflag, size = 0x4, scoped, tag = 'scoped memory for tpu_custom_call.1']
    #allocation6 [shape = 'u8[512]{0}', space=vmem, size = 0x400, scoped, tag = 'output window, operand 0, single buffered']
    %8 = vsyncpa [#allocation4], 0
    %9 = vsyncpa [#allocation5], 0
    // Predicated region
    $region2: #{tpu_custom_call.1} parent=1 // pred_check
      _
    $region3: #{tpu_custom_call.1} parent=1 // pred_check_branch
      %11 = sbr.rel (0) target = $region5
    $region4: #{tpu_custom_call.1} parent=1 // pred_region
      _
    $region5: #{tpu_custom_call.1} parent=1 // pred_fallthru
      _
    // Predicated region
    $region6: #{tpu_custom_call.1} parent=1 // pred_check
      _
    $region7: #{tpu_custom_call.1} parent=1 // pred_check_branch
      %13 = sbr.rel (0) target = $region9
    $region8: #{tpu_custom_call.1} parent=1 // pred_region
      %s15 = ssub.s32 128, 128
      %16 = vsyncadd [#allocation4], %s15
      %s18 = sshll.u32 [#allocation3], 4
      %s19 = int_to_ptr.vmem [resolvable:$true] %s18
      %21 = dma.hbm_to_vmem [thread:$0]  %s1, 128, %s19, [#allocation4]
    $region9: #{tpu_custom_call.1} parent=1 // pred_fallthru
      _
    // Predicated region
    $region10: #{tpu_custom_call.1} parent=1 // pred_check
      _
    $region11: #{tpu_custom_call.1} parent=1 // pred_check_branch
      %23 = sbr.rel (0) target = $region13
    $region12: #{tpu_custom_call.1} parent=1 // pred_region
      _
    $region13: #{tpu_custom_call.1} parent=1 // pred_fallthru
      _
    // Predicated region
    $region14: #{tpu_custom_call.1} parent=1 // pred_check
      _
    $region15: #{tpu_custom_call.1} parent=1 // pred_check_branch
      %25 = sbr.rel (0) target = $region17
    $region16: #{tpu_custom_call.1} parent=1 // pred_region
      %26 = dma.done [#allocation4], 128
    $region17: #{tpu_custom_call.1} parent=1 // pred_fallthru
      _
    %p27 = scmp.eq.s32.totalorder 0, 0
    // Predicated region
    $region18: #{tpu_custom_call.1} parent=1 // pred_check
      %p28 = pneg %p27
    $region19: #{tpu_custom_call.1} parent=1 // pred_check_branch
      %30 = sbr.rel (%p28) target = $region21
    $region20: #{tpu_custom_call.1} parent=1 // pred_region
      %vm31 = vcmask 0
      %32 = vst.msk [vmem:[#allocation2] sm:$0x1] %vm31, 0.0
    $region21: #{tpu_custom_call.1} parent=1 // pred_fallthru
      _
    %v33 = vld [vmem:[%s0] sm:$0xff]
    %v34 = vld [vmem:[#allocation3] sm:$0xff]
    %v35 = vld [vmem:[%s2] sm:$0xff]
    %v36 = vsub.f32 %v33, %v34
    %v37 = vadd.f32 %v36, 1e-06
    %v38 = vmul.f32 %v37, %v37
    %vm39 = vcmask 261120
    %v40 = vsel %vm39, %v38, 0.0
    %41 = vadd.xlane.f32.xlu0 %v40
    %v42 = vpop.xlane.xlu0 %41
    %v43 = vrsqrt.pop %v42
    %v44 = vmul.f32 %v42, %v43
    %vm45 = vcmp.eq.f32.partialorder %v42, inf
    %v46 = vsel %vm45, %v42, %v44
    %vm47 = vcmp.eq.f32.partialorder %v42, 0.0
    %v48 = vand.u32 %v42, 2147483648
    %v49 = vsel %vm47, %v48, %v46
    %v50 = vsub.f32 2.0, %v49
    %v51 = vmul.f32 %v50, %v50
    %v52 = vmax.f32 %v51, 0.0
    %v53 = vmul.f32 %v35, %v42
    %v54 = vsub.f32 1.0, %v35
    %v55 = vmul.f32 %v54, %v52
    %v56 = vadd.f32 %v53, %v55
    %s57 = smul.u32 0, 8
    %v58 = vlaneseq
    %v59 = vshrl.u32 %v58, 7
    %v60 = vstv %s57
    %v61 = vadd.s32 %v60, %v59
    %vm62 = vcmp.lt.s32.totalorder %v61, 8
    %v63 = vsel %vm62, %v56, 0.0
    %v64 = vld [vmem:[#allocation2] sm:$0x1]
    %vm65 = vcmask 7168
    %v66 = vsel %vm65, %v63, 0.0
    %v67 = vrot.slane %v66, 4
    %v68 = vadd.f32 %v66, %v67
    %v69 = vrot.slane %v68, 2
    %v70 = vadd.f32 %v68, %v69
    %v71 = vrot.slane %v70, 1
    %v72 = vadd.f32 %v70, %v71
    %v73 = vadd.f32 %v64, %v72
    %vm74 = vcmask 0
    %75 = vst.msk [vmem:[#allocation2] sm:$0x1] %vm74, %v73
    // Predicated region
    $region22: #{tpu_custom_call.1} parent=1 // pred_check
      %p76 = pneg %p27
    $region23: #{tpu_custom_call.1} parent=1 // pred_check_branch
      %78 = sbr.rel (%p76) target = $region25
    $region24: #{tpu_custom_call.1} parent=1 // pred_region
      %v79 = vld [vmem:[#allocation2] sm:$0x1]
      %v80 = vmul.f32 %v79, 0.125
      %81 = vst.msk [vmem:[#allocation6] sm:$0x1] %vm74, %v80
    $region25: #{tpu_custom_call.1} parent=1 // pred_fallthru
      _
    // Predicated region
    $region26: #{tpu_custom_call.1} parent=1 // pred_check
      _
    $region27: #{tpu_custom_call.1} parent=1 // pred_check_branch
      %83 = sbr.rel (0) target = $region29
    $region28: #{tpu_custom_call.1} parent=1 // pred_region
      %s85 = ssub.s32 16, 16
      %86 = vsyncadd [#allocation5], %s85
      %s88 = sshll.u32 [#allocation6], 4
      %s89 = int_to_ptr.vmem [resolvable:$true] %s88
      %91 = dma.vmem_to_hbm [thread:$0]  %s89, 16, %s3, [#allocation5]
    $region29: #{tpu_custom_call.1} parent=1 // pred_fallthru
      _
    // Predicated region
    $region30: #{tpu_custom_call.1} parent=1 // pred_check
      _
    $region31: #{tpu_custom_call.1} parent=1 // pred_check_branch
      %93 = sbr.rel (0) target = $region33
    $region32: #{tpu_custom_call.1} parent=1 // pred_region
      %94 = dma.done [#allocation5], 16
    $region33: #{tpu_custom_call.1} parent=1 // pred_fallthru
      _
    %95 = vsyncpa [#allocation4], 1
    %96 = vsyncpa [#allocation5], 1

</llo_original>
